<compile_context>
chip_gen: v7x
topology: tpu7x:2x2x1
jax: 0.10.0
libtpu: 0.0.40
codegen_flags: <defaults>
</compile_context>

<pallas_src>
import jax
import jax.numpy as jnp
from jax import lax
from jax.experimental import pallas as pl
from jax.experimental.pallas import tpu as pltpu

# ---- deterministic "augmentation" hyper-parameters (synthetic, no checkpoint) ----
FS = 500.0          # sampling frequency (Hz)
LAM = 0.7           # mixup lambda (shared between sig and label)
EPS_SMOOTH = 0.1    # label smoothing epsilon
RENORM_EPS = 1e-6   # numerical floor for renormalize


def _sig_kernel(sig_ref, prev_ref, drift_ref, smask_ref, o_ref):
    """Signal pipeline for one block of TB samples.

    sig_ref   : (TB, C, L)  original samples
    prev_ref  : (1, C, L)   sample preceding this block (mixup boundary partner)
    drift_ref : (1, 1, L)   precomputed baseline-wander drift (f32)
    smask_ref : (TB, 1, L)  per-sample flip-sign * masking window (f32)
    o_ref     : (TB, C, L)
    """
    x = sig_ref[...].astype(jnp.float32)
    prev = prev_ref[...].astype(jnp.float32)
    drift = drift_ref[...]          # (1,1,L) broadcasts over (TB,C,L)
    smask = smask_ref[...]          # (TB,1,L) broadcasts over (TB,C,L)

    # Mixup partner = fixed shift by one sample along the batch.  Rows 1..TB-1
    # pair with rows 0..TB-2 (already resident in VMEM); row 0 pairs with the
    # separately DMA'd boundary sample.
    tb = x.shape[0]
    if tb > 1:
        xp = jnp.concatenate([prev, x[: tb - 1]], axis=0)
    else:
        xp = prev

    # baseline wander + mixup + flip + mask.  drift is linear through the
    # blend: lam*(x+d) + (1-lam)*(xp+d) = blend + d, and flip/mask commute
    # into one signed-mask multiply.
    x = (LAM * x + (1.0 - LAM) * xp + drift) * smask

    # random renormalize: per-(sample, channel) zero-mean / unit-std.
    # Two-pass mean/variance (data already resident in VMEM, so the second
    # pass is cheap VPU work on a bandwidth-bound kernel).
    inv_l = 1.0 / x.shape[-1]
    mean = jnp.sum(x, axis=-1, keepdims=True) * inv_l
    xc = x - mean
    var = jnp.sum(xc * xc, axis=-1, keepdims=True) * inv_l
    o_ref[...] = (xc * lax.rsqrt(var + RENORM_EPS)).astype(o_ref.dtype)


def _vmem_capacity_bytes():
    """Generation-aware VMEM capacity (falls back to the v7x-safe 64 MiB)."""
    try:
        return int(pltpu.get_tpu_info().vmem_capacity_bytes)
    except Exception:
        return 64 << 20


def _per_sample_bytes(C, L):
    """Per-sample VMEM bytes for one pipeline buffer, sublane-padding aware."""
    cpad = -(-C // 8) * 8                 # f32: C=12 pads to 16 sublanes
    return (2 * cpad * L + 8 * L) * 4     # sig block + out block + mask block


def _fixed_bytes(C, L):
    cpad = -(-C // 8) * 8
    return (cpad * L + 8 * L) * 4         # boundary partner + drift


def _choose_tb(B, C, L, vmem_cap):
    """Samples-per-block: divisor of B, padding-aware VMEM budget, deep grid."""
    per_sample = _per_sample_bytes(C, L)
    fixed = _fixed_bytes(C, L)

    # Tiny problem: a single block avoids per-step (~0.35 us) pipeline overhead.
    if B * per_sample + fixed <= (2 << 20):
        return B

    # Generation-aware tiler budget: v5e/v6e have 128 MiB physical VMEM,
    # v7x only 64 MiB per TensorCore.  Double-buffered blocks must fit.
    budget = (48 << 20) if vmem_cap >= (100 << 20) else (20 << 20)
    max_tb = max(1, (budget // 2 - fixed) // per_sample)
    divs = [d for d in range(1, B + 1) if B % d == 0 and d <= max_tb] or [1]

    # Prefer an even grid of >= 4 steps (feeds both v7x TensorCores and gives
    # the DMA pipeline depth), then even >= 2, then >= 2, else whatever fits.
    for pred in (lambda d: B // d >= 4 and (B // d) % 2 == 0,
                 lambda d: B // d >= 2 and (B // d) % 2 == 0,
                 lambda d: B // d >= 2):
        cand = [d for d in divs if pred(d)]
        if cand:
            return max(cand)
    return max(divs)


def augmenter_manager_forward(sig, label, *extra_tensors,
                              flip_sign=None, mask=None):
    """JAX/Pallas equivalent of AugmenterManager.forward (random=False)."""
    B, C, L = sig.shape

    # deterministic per-sample "random" parameters -------------------------
    if flip_sign is None:
        flip_sign = jnp.where(jnp.arange(B) % 2 == 0, 1.0, -1.0).astype(jnp.float32)
    if mask is None:
        idx = jnp.arange(L)[None, :]
        starts = (32 + 64 * jnp.arange(B))[:, None]
        mask = jnp.where((idx >= starts) & (idx < starts + 40), 0.0, 1.0)
    # fold flip into the mask: one (B,1,L) f32 input, one multiply in-kernel.
    signed_mask = (mask.reshape(B, 1, L).astype(jnp.float32)
                   * flip_sign.reshape(B, 1, 1).astype(jnp.float32))

    # baseline-wander drift depends only on the time index: precompute once.
    t = jnp.arange(L, dtype=jnp.float32)
    drift = (0.05 * jnp.sin(2.0 * jnp.pi * 0.5 * t / FS)
             + 0.03 * jnp.sin(2.0 * jnp.pi * 1.0 * t / FS + 0.7)
             ).reshape(1, 1, L).astype(jnp.float32)

    # block / grid sizing (generation- and padding-aware) -------------------
    vmem_cap = _vmem_capacity_bytes()
    TB = _choose_tb(B, C, L, vmem_cap)
    nb = B // TB
    block_bytes = TB * _per_sample_bytes(C, L) + _fixed_bytes(C, L)
    limit_cap = (96 << 20) if vmem_cap >= (100 << 20) else (44 << 20)
    vmem_limit = int(min(max(3 * block_bytes, 16 << 20), limit_cap))

    sig_out = pl.pallas_call(
        _sig_kernel,
        out_shape=jax.ShapeDtypeStruct((B, C, L), sig.dtype),
        grid_spec=pltpu.PrefetchScalarGridSpec(
            num_scalar_prefetch=0,
            grid=(nb,),
            in_specs=[
                pl.BlockSpec((TB, C, L), lambda i: (i, 0, 0)),
                # mixup boundary partner: the single sample just before this
                # block, i.e. sample (i*TB - 1) mod B (block size 1 on batch,
                # so the block index equals the sample index).
                pl.BlockSpec((1, C, L),
                             lambda i, TB=TB, B=B: ((i * TB + B - 1) % B, 0, 0)),
                pl.BlockSpec((1, 1, L), lambda i: (0, 0, 0)),
                pl.BlockSpec((TB, 1, L), lambda i: (i, 0, 0)),
            ],
            out_specs=pl.BlockSpec((TB, C, L), lambda i: (i, 0, 0)),
        ),
        compiler_params=pltpu.CompilerParams(
            dimension_semantics=("parallel",),
            vmem_limit_bytes=vmem_limit),
    )(sig, sig, drift, signed_mask)

    # label path: smoothing + mixup on a tiny (B, n_classes) tensor.
    # Kept in plain jnp (XLA fuses it); a pallas_call here is pure overhead.
    n_classes = label.shape[-1]
    lab_f = label.astype(jnp.float32)
    lab_p = jnp.roll(lab_f, shift=1, axis=0)      # same fixed 1-sample shift
    ls = lab_f * (1.0 - EPS_SMOOTH) + EPS_SMOOTH / n_classes
    lsp = lab_p * (1.0 - EPS_SMOOTH) + EPS_SMOOTH / n_classes
    label_out = (LAM * ls + (1.0 - LAM) * lsp).astype(label.dtype)

    # extra tensors are passed through unchanged (as the example augmenters do).
    return (sig_out, label_out, *extra_tensors)


if __name__ == "__main__":
    key = jax.random.PRNGKey(0)
    k_sig, k_lab, k_m1, k_m2 = jax.random.split(key, 4)

    B, C, L, N_CLASSES = 4, 12, 512, 26
    sig = jax.random.normal(k_sig, (B, C, L), dtype=jnp.float32)
    label = jax.random.bernoulli(k_lab, 0.5, (B, N_CLASSES)).astype(jnp.float32)
    mask1 = jax.random.bernoulli(k_m1, 0.5, (B, L, 3)).astype(jnp.float32)
    mask2 = jax.random.randint(k_m2, (B, L), 0, 3, dtype=jnp.int32)

    sig_o, label_o, mask1_o, mask2_o = augmenter_manager_forward(
        sig, label, mask1, mask2)

    jax.block_until_ready((sig_o, label_o, mask1_o, mask2_o))

    assert sig_o.shape == sig.shape and sig_o.dtype == sig.dtype
    assert label_o.shape == label.shape and label_o.dtype == label.dtype
    assert mask1_o.shape == mask1.shape and mask2_o.shape == mask2.shape
    assert bool(jnp.all(jnp.isfinite(sig_o)))
    print("KERNEL_OK")
</pallas_src>

<mosaic_0001>
module attributes {stable_mosaic.version = 11 : i64} {
  func.func @_sig_kernel(%arg0: i32, %arg1: memref<4x12x512xf32, #tpu.memory_space<vmem>>, %arg2: memref<1x12x512xf32, #tpu.memory_space<vmem>>, %arg3: memref<1x1x512xf32, #tpu.memory_space<vmem>>, %arg4: memref<4x1x512xf32, #tpu.memory_space<vmem>>, %arg5: memref<4x12x512xf32, #tpu.memory_space<vmem>>) attributes {dimension_semantics = [#tpu.dimension_semantics<parallel>], iteration_bounds = array<i64: 1>, scalar_prefetch = 0 : i64, scratch_operands = 0 : i64, tpu.core_type = #tpu.core_type<tc>, window_params = [{transform_indices = @transform_0, window_bounds = array<i64: 4, 12, 512>}, {transform_indices = @transform_1, window_bounds = array<i64: 1, 12, 512>}, {pipeline_mode = #tpu.pipeline_mode<synchronous>, transform_indices = @transform_2, window_bounds = array<i64: 1, 1, 512>}, {transform_indices = @transform_3, window_bounds = array<i64: 4, 1, 512>}, {transform_indices = @transform_4, window_bounds = array<i64: 4, 12, 512>}]} {
    %c0 = arith.constant 0 : index
    %c0_0 = arith.constant 0 : index
    %c0_1 = arith.constant 0 : index
    %0 = vector.load %arg1[%c0, %c0_0, %c0_1] : memref<4x12x512xf32, #tpu.memory_space<vmem>>, vector<4x12x512xf32>
    %c0_2 = arith.constant 0 : index
    %c0_3 = arith.constant 0 : index
    %c0_4 = arith.constant 0 : index
    %1 = vector.load %arg2[%c0_2, %c0_3, %c0_4] : memref<1x12x512xf32, #tpu.memory_space<vmem>>, vector<1x12x512xf32>
    %c0_5 = arith.constant 0 : index
    %c0_6 = arith.constant 0 : index
    %c0_7 = arith.constant 0 : index
    %2 = vector.load %arg3[%c0_5, %c0_6, %c0_7] : memref<1x1x512xf32, #tpu.memory_space<vmem>>, vector<1x1x512xf32>
    %c0_8 = arith.constant 0 : index
    %c0_9 = arith.constant 0 : index
    %c0_10 = arith.constant 0 : index
    %3 = vector.load %arg4[%c0_8, %c0_9, %c0_10] : memref<4x1x512xf32, #tpu.memory_space<vmem>>, vector<4x1x512xf32>
    %4 = vector.extract_strided_slice %0 {offsets = [0, 0, 0], sizes = [3, 12, 512], strides = [1, 1, 1]} : vector<4x12x512xf32> to vector<3x12x512xf32>
    %5 = tpu.concatenate %1, %4 in 0 : vector<1x12x512xf32>, vector<3x12x512xf32> -> vector<4x12x512xf32>
    %cst = arith.constant 0.699999988 : f32
    %6 = vector.broadcast %cst : f32 to vector<4x12x512xf32>
    %7 = arith.mulf %6, %0 : vector<4x12x512xf32>
    %cst_11 = arith.constant 3.000000e-01 : f32
    %8 = vector.broadcast %cst_11 : f32 to vector<4x12x512xf32>
    %9 = arith.mulf %8, %5 : vector<4x12x512xf32>
    %10 = arith.addf %7, %9 : vector<4x12x512xf32>
    %11 = vector.broadcast %2 : vector<1x1x512xf32> to vector<4x12x512xf32>
    %12 = arith.addf %10, %11 : vector<4x12x512xf32>
    %13 = vector.broadcast %3 : vector<4x1x512xf32> to vector<4x12x512xf32>
    %14 = arith.mulf %12, %13 : vector<4x12x512xf32>
    %cst_12 = arith.constant dense<0.000000e+00> : vector<4x12xf32>
    %15 = vector.multi_reduction <add>, %14, %cst_12 [2] : vector<4x12x512xf32> to vector<4x12xf32>
    %16 = vector.shape_cast %15 : vector<4x12xf32> to vector<4x12x1xf32>
    %cst_13 = arith.constant 0.001953125 : f32
    %17 = vector.broadcast %cst_13 : f32 to vector<4x12x1xf32>
    %18 = arith.mulf %16, %17 : vector<4x12x1xf32>
    %19 = vector.broadcast %18 : vector<4x12x1xf32> to vector<4x12x512xf32>
    %20 = arith.subf %14, %19 : vector<4x12x512xf32>
    %21 = arith.mulf %20, %20 : vector<4x12x512xf32>
    %cst_14 = arith.constant dense<0.000000e+00> : vector<4x12xf32>
    %22 = vector.multi_reduction <add>, %21, %cst_14 [2] : vector<4x12x512xf32> to vector<4x12xf32>
    %23 = vector.shape_cast %22 : vector<4x12xf32> to vector<4x12x1xf32>
    %cst_15 = arith.constant 0.001953125 : f32
    %24 = vector.broadcast %cst_15 : f32 to vector<4x12x1xf32>
    %25 = arith.mulf %23, %24 : vector<4x12x1xf32>
    %cst_16 = arith.constant 9.99999997E-7 : f32
    %26 = vector.broadcast %cst_16 : f32 to vector<4x12x1xf32>
    %27 = arith.addf %25, %26 : vector<4x12x1xf32>
    %28 = math.rsqrt %27 : vector<4x12x1xf32>
    %29 = vector.broadcast %28 : vector<4x12x1xf32> to vector<4x12x512xf32>
    %30 = arith.mulf %20, %29 : vector<4x12x512xf32>
    %c0_17 = arith.constant 0 : index
    %c0_18 = arith.constant 0 : index
    %c0_19 = arith.constant 0 : index
    %31 = vector.load %arg5[%c0_17, %c0_18, %c0_19] : memref<4x12x512xf32, #tpu.memory_space<vmem>>, vector<4x12x512xf32>
    tpu.vector_store %arg5[%c0_17, %c0_18, %c0_19], %30 {strides = array<i32>} : memref<4x12x512xf32, #tpu.memory_space<vmem>>, vector<4x12x512xf32>,
    return
  }
  func.func @transform_0(%arg0: i32) -> (i32, i32, i32) {
    %c0_i32 = arith.constant 0 : i32
    %c0_i32_0 = arith.constant 0 : i32
    %c0_i32_1 = arith.constant 0 : i32
    return %arg0, %c0_i32, %c0_i32_0 : i32, i32, i32
  }
  func.func @transform_1(%arg0: i32) -> (i32, i32, i32) {
    %c4_i32 = arith.constant 4 : i32
    %0 = arith.muli %arg0, %c4_i32 : i32
    %c4_i32_0 = arith.constant 4 : i32
    %1 = arith.addi %0, %c4_i32_0 : i32
    %c1_i32 = arith.constant 1 : i32
    %2 = arith.subi %1, %c1_i32 : i32
    %c4_i32_1 = arith.constant 4 : i32
    %c0_i32 = arith.constant 0 : i32
    %3 = arith.cmpi eq, %c4_i32_1, %c0_i32 : i32
    %c1_i32_2 = arith.constant 1 : i32
    %4 = arith.select %3, %c1_i32_2, %c4_i32_1 : i32
    %5 = arith.remsi %2, %4 : i32
    %c0_i32_3 = arith.constant 0 : i32
    %6 = arith.cmpi ne, %5, %c0_i32_3 : i32
    %c0_i32_4 = arith.constant 0 : i32
    %7 = arith.cmpi slt, %5, %c0_i32_4 : i32
    %c0_i32_5 = arith.constant 0 : i32
    %8 = arith.cmpi slt, %4, %c0_i32_5 : i32
    %9 = arith.xori %7, %8 : i1
    %10 = arith.andi %9, %6 : i1
    %11 = arith.addi %5, %4 : i32
    %12 = arith.select %10, %11, %5 : i32
    %c0_i32_6 = arith.constant 0 : i32
    %c0_i32_7 = arith.constant 0 : i32
    %c0_i32_8 = arith.constant 0 : i32
    return %12, %c0_i32_6, %c0_i32_7 : i32, i32, i32
  }
  func.func @transform_2(%arg0: i32) -> (i32, i32, i32) {
    %c0_i32 = arith.constant 0 : i32
    %c0_i32_0 = arith.constant 0 : i32
    %c0_i32_1 = arith.constant 0 : i32
    %c0_i32_2 = arith.constant 0 : i32
    return %c0_i32, %c0_i32_0, %c0_i32_1 : i32, i32, i32
  }
  func.func @transform_3(%arg0: i32) -> (i32, i32, i32) {
    %c0_i32 = arith.constant 0 : i32
    %c0_i32_0 = arith.constant 0 : i32
    %c0_i32_1 = arith.constant 0 : i32
    return %arg0, %c0_i32, %c0_i32_0 : i32, i32, i32
  }
  func.func @transform_4(%arg0: i32) -> (i32, i32, i32) {
    %c0_i32 = arith.constant 0 : i32
    %c0_i32_0 = arith.constant 0 : i32
    %c0_i32_1 = arith.constant 0 : i32
    return %arg0, %c0_i32, %c0_i32_0 : i32, i32, i32
  }
}

</mosaic_0001>

<llo_original>
// kernel: tpu_custom_call.1
$region0: #{tpu_custom_call.1}
  #allocation0 [shape = 'u32[]', space=smem, size = 0x4, offset = 0x4, fixed_abs, tag = 'smem constant byte address 0x4 - core index']
  #allocation1 [shape = 'u32[144,128]{1,0:T(1,128)}', space=vmem, size = 0x12000, scoped, tag = 'internal scratch']
  %s0 = inlined_call_operand.vmem [shape: f32[4,12,512], index: 0, kind: input, shape index: {}]
  %s1 = inlined_call_operand.vmem [shape: f32[4,12,512], index: 1, kind: input, shape index: {}]
  %s2 = inlined_call_operand.vmem [shape: f32[1,1,512], index: 2, kind: input, shape index: {}]
  %s3 = inlined_call_operand.vmem [shape: f32[4,1,512], index: 3, kind: input, shape index: {}]
  %s4 = inlined_call_operand.vmem [shape: f32[4,12,512], index: 4, kind: output, shape index: {}]
  %s5 = sld [smem:[#allocation0]]
  $region26: #{tpu_custom_call.1} parent=0
    _
  %s7 = ssub.s32 1, %s5
  %s8 = scalar_select 0, %s7, %s5
  // Predicated region
  $region2: #{tpu_custom_call.1} parent=0 // pred_check
    _
  $region3: #{tpu_custom_call.1} parent=0 // pred_check_branch
    %10 = sbr.rel (0) target = $region5
  $region4: #{tpu_custom_call.1} parent=0 // pred_region
    _
  $region5: #{tpu_custom_call.1} parent=0 // pred_fallthru
    _
  // Predicated region
  $region6: #{tpu_custom_call.1} parent=0 // pred_check
    _
  $region7: #{tpu_custom_call.1} parent=0 // pred_check_branch
    %12 = sbr.rel (0) target = $region9
  $region8: #{tpu_custom_call.1} parent=0 // pred_region
    %s13 = smul.u32 0, 4
    %s14 = sadd.s32 %s13, 3
    %p15 = scmp.lt.s32.totalorder %s14, 0
    %s16 = ssub.s32 0, %s14
    %s17 = scalar_select %p15, %s16, %s14
    %s18 = sand.u32 %s17, 3
    %s19 = ssub.s32 0, %s18
    %s20 = scalar_select %p15, %s19, %s18
    %p21 = scmp.ne.s32.totalorder %s20, 0
    %p22 = scmp.lt.s32.totalorder %s20, 0
    %p23 = pnand %p22, %p21
    %p24 = pneg %p23
    %s25 = sadd.s32 %s20, 4
    %s26 = scalar_select %p24, %s25, %s20
    %p27 = scmp.lt.s32.totalorder %s26, 3
    %s28 = scalar_select %p27, %s26, 3
    %s29 = smul.addr %s28, 8
    %s30 = smul.addr %s29, 8
    %s31 = scalar_lea.vmem %s1, %s30
    %s32 = smul.u32 0, 4
    %s33 = sadd.s32 %s32, 3
    %p34 = scmp.lt.s32.totalorder %s33, 0
    %s35 = ssub.s32 0, %s33
    %s36 = scalar_select %p34, %s35, %s33
    %s37 = sand.u32 %s36, 3
    %s38 = ssub.s32 0, %s37
    %s39 = scalar_select %p34, %s38, %s37
    %p40 = scmp.ne.s32.totalorder %s39, 0
    %p41 = scmp.lt.s32.totalorder %s39, 0
    %p42 = pnand %p41, %p40
    %p43 = pneg %p42
    %s44 = sadd.s32 %s39, 4
    %s45 = scalar_select %p43, %s44, %s39
  $region9: #{tpu_custom_call.1} parent=0 // pred_fallthru
    _
  // Predicated region
  $region10: #{tpu_custom_call.1} parent=0 // pred_check
    _
  $region11: #{tpu_custom_call.1} parent=0 // pred_check_branch
    %47 = sbr.rel (0) target = $region13
  $region12: #{tpu_custom_call.1} parent=0 // pred_region
    _
  $region13: #{tpu_custom_call.1} parent=0 // pred_fallthru
    _
  // Predicated region
  $region14: #{tpu_custom_call.1} parent=0 // pred_check
    _
  $region15: #{tpu_custom_call.1} parent=0 // pred_check_branch
    %49 = sbr.rel (0) target = $region17
  $region16: #{tpu_custom_call.1} parent=0 // pred_region
    _
  $region17: #{tpu_custom_call.1} parent=0 // pred_fallthru
    _
  %s50 = smul.u32 0, 4
  %s51 = sadd.s32 %s50, 3
  %p52 = scmp.lt.s32.totalorder %s51, 0
  %s53 = ssub.s32 0, %s51
  %s54 = scalar_select %p52, %s53, %s51
  %s55 = sand.u32 %s54, 3
  %s56 = ssub.s32 0, %s55
  %s57 = scalar_select %p52, %s56, %s55
  %p58 = scmp.ne.s32.totalorder %s57, 0
  %p59 = scmp.lt.s32.totalorder %s57, 0
  %p60 = pnand %p59, %p58
  %p61 = pneg %p60
  %s62 = sadd.s32 %s57, 4
  %s63 = scalar_select %p61, %s62, %s57
  %p64 = scmp.lt.s32.totalorder %s63, 3
  %s65 = scalar_select %p64, %s63, 3
  %s66 = smul.addr %s65, 8
  %s67 = smul.addr %s66, 8
  %s68 = scalar_lea.vmem %s1, %s67
  %s69 = smul.u32 0, 4
  %s70 = sadd.s32 %s69, 3
  %p71 = scmp.lt.s32.totalorder %s70, 0
  %s72 = ssub.s32 0, %s70
  %s73 = scalar_select %p71, %s72, %s70
  %s74 = sand.u32 %s73, 3
  %s75 = ssub.s32 0, %s74
  %s76 = scalar_select %p71, %s75, %s74
  %p77 = scmp.ne.s32.totalorder %s76, 0
  %p78 = scmp.lt.s32.totalorder %s76, 0
  %p79 = pnand %p78, %p77
  %p80 = pneg %p79
  %s81 = sadd.s32 %s76, 4
  %s82 = scalar_select %p80, %s81, %s76
  %p83 = scmp.lt.s32.totalorder %s82, 3
  %s84 = scalar_select %p83, %s82, 3
  %s85 = smul.addr %s84, 8
  %s86 = smul.addr %s85, 8
  %s87 = scalar_lea.vmem %s1, %s86
  %s88 = smul.u32 0, 4
  %s89 = sadd.s32 %s88, 3
  %p90 = scmp.lt.s32.totalorder %s89, 0
  %s91 = ssub.s32 0, %s89
  %s92 = scalar_select %p90, %s91, %s89
  %s93 = sand.u32 %s92, 3
  %s94 = ssub.s32 0, %s93
  %s95 = scalar_select %p90, %s94, %s93
  %p96 = scmp.ne.s32.totalorder %s95, 0
  %p97 = scmp.lt.s32.totalorder %s95, 0
  %p98 = pnand %p97, %p96
  %p99 = pneg %p98
  %s100 = sadd.s32 %s95, 4
  %s101 = scalar_select %p99, %s100, %s95
  %v102 = vld [vmem:[%s0] sm:$0xff]
  %v103 = vld [vmem:[%s0 + $0x8] sm:$0xff]
  %v104 = vld [vmem:[%s0 + $0x10] sm:$0xff]
  %v105 = vld [vmem:[%s0 + $0x18] sm:$0xff]
  %v106 = vld [vmem:[%s0 + $0x20] sm:$0xf]
  %v107 = vld [vmem:[%s0 + $0x28] sm:$0xf]
  %v108 = vld [vmem:[%s0 + $0x30] sm:$0xf]
  %v109 = vld [vmem:[%s0 + $0x38] sm:$0xf]
  %v110 = vld [vmem:[%s0 + $0x40] sm:$0xff]
  %v111 = vld [vmem:[%s0 + $0x48] sm:$0xff]
  %v112 = vld [vmem:[%s0 + $0x50] sm:$0xff]
  %v113 = vld [vmem:[%s0 + $0x58] sm:$0xff]
  %v114 = vld [vmem:[%s0 + $0x60] sm:$0xf]
  %v115 = vld [vmem:[%s0 + $0x68] sm:$0xf]
  %v116 = vld [vmem:[%s0 + $0x70] sm:$0xf]
  %v117 = vld [vmem:[%s0 + $0x78] sm:$0xf]
  %v118 = vld [vmem:[%s0 + $0x80] sm:$0xff]
  %v119 = vld [vmem:[%s0 + $0x88] sm:$0xff]
  %v120 = vld [vmem:[%s0 + $0x90] sm:$0xff]
  %v121 = vld [vmem:[%s0 + $0x98] sm:$0xff]
  %v122 = vld [vmem:[%s0 + $0xa0] sm:$0xf]
  %v123 = vld [vmem:[%s0 + $0xa8] sm:$0xf]
  %v124 = vld [vmem:[%s0 + $0xb0] sm:$0xf]
  %v125 = vld [vmem:[%s0 + $0xb8] sm:$0xf]
  %v126 = vld [vmem:[%s0 + $0xc0] sm:$0xff]
  %v127 = vld [vmem:[%s0 + $0xc8] sm:$0xff]
  %v128 = vld [vmem:[%s0 + $0xd0] sm:$0xff]
  %v129 = vld [vmem:[%s0 + $0xd8] sm:$0xff]
  %v130 = vld [vmem:[%s0 + $0xe0] sm:$0xf]
  %v131 = vld [vmem:[%s0 + $0xe8] sm:$0xf]
  %v132 = vld [vmem:[%s0 + $0xf0] sm:$0xf]
  %v133 = vld [vmem:[%s0 + $0xf8] sm:$0xf]
  %v134 = vld [vmem:[%s87] sm:$0xff]
  %v135 = vld [vmem:[%s87 + $0x8] sm:$0xff]
  %v136 = vld [vmem:[%s87 + $0x10] sm:$0xff]
  %v137 = vld [vmem:[%s87 + $0x18] sm:$0xff]
  %v138 = vld [vmem:[%s87 + $0x20] sm:$0xf]
  %v139 = vld [vmem:[%s87 + $0x28] sm:$0xf]
  %v140 = vld [vmem:[%s87 + $0x30] sm:$0xf]
  %v141 = vld [vmem:[%s87 + $0x38] sm:$0xf]
  %v142 = vld [vmem:[%s2] sm:$0xf]
  %v143 = vld [vmem:[%s3] sm:$0xf]
  %v144 = vld [vmem:[%s3 + $0x4] sm:$0xf]
  %v145 = vld [vmem:[%s3 + $0x8] sm:$0xf]
  %v146 = vld [vmem:[%s3 + $0xc] sm:$0xf]
  %v147 = vmul.f32 %v102, 0.7
  %v148 = vmul.f32 %v103, 0.7
  %v149 = vmul.f32 %v104, 0.7
  %v150 = vmul.f32 %v105, 0.7
  %v151 = vmul.f32 %v106, 0.7
  %v152 = vmul.f32 %v107, 0.7
  %v153 = vmul.f32 %v108, 0.7
  %v154 = vmul.f32 %v109, 0.7
  %v155 = vmul.f32 %v110, 0.7
  %v156 = vmul.f32 %v111, 0.7
  %v157 = vmul.f32 %v112, 0.7
  %v158 = vmul.f32 %v113, 0.7
  %v159 = vmul.f32 %v114, 0.7
  %v160 = vmul.f32 %v115, 0.7
  %v161 = vmul.f32 %v116, 0.7
  %v162 = vmul.f32 %v117, 0.7
  %v163 = vmul.f32 %v118, 0.7
  %v164 = vmul.f32 %v119, 0.7
  %v165 = vmul.f32 %v120, 0.7
  %v166 = vmul.f32 %v121, 0.7
  %v167 = vmul.f32 %v122, 0.7
  %v168 = vmul.f32 %v123, 0.7
  %v169 = vmul.f32 %v124, 0.7
  %v170 = vmul.f32 %v125, 0.7
  %v171 = vmul.f32 %v126, 0.7
  %v172 = vmul.f32 %v127, 0.7
  %v173 = vmul.f32 %v128, 0.7
  %v174 = vmul.f32 %v129, 0.7
  %v175 = vmul.f32 %v130, 0.7
  %v176 = vmul.f32 %v131, 0.7
  %v177 = vmul.f32 %v132, 0.7
  %v178 = vmul.f32 %v133, 0.7
  %v179 = vmul.f32 %v134, 0.3
  %v180 = vmul.f32 %v135, 0.3
  %v181 = vmul.f32 %v136, 0.3
  %v182 = vmul.f32 %v137, 0.3
  %v183 = vmul.f32 %v138, 0.3
  %v184 = vmul.f32 %v139, 0.3
  %v185 = vmul.f32 %v140, 0.3
  %v186 = vmul.f32 %v141, 0.3
  %v187 = vmul.f32 %v102, 0.3
  %v188 = vmul.f32 %v103, 0.3
  %v189 = vmul.f32 %v104, 0.3
  %v190 = vmul.f32 %v105, 0.3
  %v191 = vmul.f32 %v106, 0.3
  %v192 = vmul.f32 %v107, 0.3
  %v193 = vmul.f32 %v108, 0.3
  %v194 = vmul.f32 %v109, 0.3
  %v195 = vmul.f32 %v110, 0.3
  %v196 = vmul.f32 %v111, 0.3
  %v197 = vmul.f32 %v112, 0.3
  %v198 = vmul.f32 %v113, 0.3
  %v199 = vmul.f32 %v114, 0.3
  %v200 = vmul.f32 %v115, 0.3
  %v201 = vmul.f32 %v116, 0.3
  %v202 = vmul.f32 %v117, 0.3
  %v203 = vmul.f32 %v118, 0.3
  %v204 = vmul.f32 %v119, 0.3
  %v205 = vmul.f32 %v120, 0.3
  %v206 = vmul.f32 %v121, 0.3
  %v207 = vmul.f32 %v122, 0.3
  %v208 = vmul.f32 %v123, 0.3
  %v209 = vmul.f32 %v124, 0.3
  %v210 = vmul.f32 %v125, 0.3
  %v211 = vadd.f32 %v147, %v179
  %v212 = vadd.f32 %v148, %v180
  %v213 = vadd.f32 %v149, %v181
  %v214 = vadd.f32 %v150, %v182
  %v215 = vadd.f32 %v151, %v183
  %v216 = vadd.f32 %v152, %v184
  %v217 = vadd.f32 %v153, %v185
  %v218 = vadd.f32 %v154, %v186
  %v219 = vadd.f32 %v155, %v187
  %v220 = vadd.f32 %v156, %v188
  %v221 = vadd.f32 %v157, %v189
  %v222 = vadd.f32 %v158, %v190
  %v223 = vadd.f32 %v159, %v191
  %v224 = vadd.f32 %v160, %v192
  %v225 = vadd.f32 %v161, %v193
  %v226 = vadd.f32 %v162, %v194
  %v227 = vadd.f32 %v163, %v195
  %v228 = vadd.f32 %v164, %v196
  %v229 = vadd.f32 %v165, %v197
  %v230 = vadd.f32 %v166, %v198
  %v231 = vadd.f32 %v167, %v199
  %v232 = vadd.f32 %v168, %v200
  %v233 = vadd.f32 %v169, %v201
  %v234 = vadd.f32 %v170, %v202
  %v235 = vadd.f32 %v171, %v203
  %v236 = vadd.f32 %v172, %v204
  %v237 = vadd.f32 %v173, %v205
  %v238 = vadd.f32 %v174, %v206
  %v239 = vadd.f32 %v175, %v207
  %v240 = vadd.f32 %v176, %v208
  %v241 = vadd.f32 %v177, %v209
  %v242 = vadd.f32 %v178, %v210
  %v244 = vlaneseq
  %v245 = vshrl.u32 %v244, 7
  %v246 = vsub.s32 0, %v245
  %v247 = vrot.slane %v142, %v246
  %v248 = vlaneseq
  %v249 = vshrl.u32 %v248, 7
  %v250 = vsub.s32 1, %v249
  %v251 = vrot.slane %v142, %v250
  %v252 = vlaneseq
  %v253 = vshrl.u32 %v252, 7
  %v254 = vsub.s32 2, %v253
  %v255 = vrot.slane %v142, %v254
  %v256 = vlaneseq
  %v257 = vshrl.u32 %v256, 7
  %v258 = vsub.s32 3, %v257
  %v259 = vrot.slane %v142, %v258
  %v264 = vadd.f32 %v211, %v247
  %v265 = vadd.f32 %v212, %v251
  %v266 = vadd.f32 %v213, %v255
  %v267 = vadd.f32 %v214, %v259
  %v268 = vadd.f32 %v215, %v247
  %v269 = vadd.f32 %v216, %v251
  %v270 = vadd.f32 %v217, %v255
  %v271 = vadd.f32 %v218, %v259
  %v272 = vadd.f32 %v219, %v247
  %v273 = vadd.f32 %v220, %v251
  %v274 = vadd.f32 %v221, %v255
  %v275 = vadd.f32 %v222, %v259
  %v276 = vadd.f32 %v223, %v247
  %v277 = vadd.f32 %v224, %v251
  %v278 = vadd.f32 %v225, %v255
  %v279 = vadd.f32 %v226, %v259
  %v280 = vadd.f32 %v227, %v247
  %v281 = vadd.f32 %v228, %v251
  %v282 = vadd.f32 %v229, %v255
  %v283 = vadd.f32 %v230, %v259
  %v284 = vadd.f32 %v231, %v247
  %v285 = vadd.f32 %v232, %v251
  %v286 = vadd.f32 %v233, %v255
  %v287 = vadd.f32 %v234, %v259
  %v288 = vadd.f32 %v235, %v247
  %v289 = vadd.f32 %v236, %v251
  %v290 = vadd.f32 %v237, %v255
  %v291 = vadd.f32 %v238, %v259
  %v292 = vadd.f32 %v239, %v247
  %v293 = vadd.f32 %v240, %v251
  %v294 = vadd.f32 %v241, %v255
  %v295 = vadd.f32 %v242, %v259
  %v300 = vlaneseq
  %v301 = vshrl.u32 %v300, 7
  %v302 = vsub.s32 0, %v301
  %v303 = vrot.slane %v143, %v302
  %v304 = vlaneseq
  %v305 = vshrl.u32 %v304, 7
  %v306 = vsub.s32 1, %v305
  %v307 = vrot.slane %v143, %v306
  %v308 = vlaneseq
  %v309 = vshrl.u32 %v308, 7
  %v310 = vsub.s32 2, %v309
  %v311 = vrot.slane %v143, %v310
  %v312 = vlaneseq
  %v313 = vshrl.u32 %v312, 7
  %v314 = vsub.s32 3, %v313
  %v315 = vrot.slane %v143, %v314
  %v316 = vlaneseq
  %v317 = vshrl.u32 %v316, 7
  %v318 = vsub.s32 0, %v317
  %v319 = vrot.slane %v144, %v318
  %v320 = vlaneseq
  %v321 = vshrl.u32 %v320, 7
  %v322 = vsub.s32 1, %v321
  %v323 = vrot.slane %v144, %v322
  %v324 = vlaneseq
  %v325 = vshrl.u32 %v324, 7
  %v326 = vsub.s32 2, %v325
  %v327 = vrot.slane %v144, %v326
  %v328 = vlaneseq
  %v329 = vshrl.u32 %v328, 7
  %v330 = vsub.s32 3, %v329
  %v331 = vrot.slane %v144, %v330
  %v332 = vlaneseq
  %v333 = vshrl.u32 %v332, 7
  %v334 = vsub.s32 0, %v333
  %v335 = vrot.slane %v145, %v334
  %v336 = vlaneseq
  %v337 = vshrl.u32 %v336, 7
  %v338 = vsub.s32 1, %v337
  %v339 = vrot.slane %v145, %v338
  %v340 = vlaneseq
  %v341 = vshrl.u32 %v340, 7
  %v342 = vsub.s32 2, %v341
  %v343 = vrot.slane %v145, %v342
  %v344 = vlaneseq
  %v345 = vshrl.u32 %v344, 7
  %v346 = vsub.s32 3, %v345
  %v347 = vrot.slane %v145, %v346
  %v348 = vlaneseq
  %v349 = vshrl.u32 %v348, 7
  %v350 = vsub.s32 0, %v349
  %v351 = vrot.slane %v146, %v350
  %v352 = vlaneseq
  %v353 = vshrl.u32 %v352, 7
  %v354 = vsub.s32 1, %v353
  %v355 = vrot.slane %v146, %v354
  %v356 = vlaneseq
  %v357 = vshrl.u32 %v356, 7
  %v358 = vsub.s32 2, %v357
  %v359 = vrot.slane %v146, %v358
  %v360 = vlaneseq
  %v361 = vshrl.u32 %v360, 7
  %v362 = vsub.s32 3, %v361
  %v363 = vrot.slane %v146, %v362
  %v380 = vmul.f32 %v264, %v303
  %v381 = vmul.f32 %v265, %v307
  %v382 = vmul.f32 %v266, %v311
  %v383 = vmul.f32 %v267, %v315
  %v384 = vmul.f32 %v268, %v303
  %v385 = vmul.f32 %v269, %v307
  %v386 = vmul.f32 %v270, %v311
  %v387 = vmul.f32 %v271, %v315
  %v388 = vmul.f32 %v272, %v319
  %v389 = vmul.f32 %v273, %v323
  %v390 = vmul.f32 %v274, %v327
  %v391 = vmul.f32 %v275, %v331
  %v392 = vmul.f32 %v276, %v319
  %v393 = vmul.f32 %v277, %v323
  %v394 = vmul.f32 %v278, %v327
  %v395 = vmul.f32 %v279, %v331
  %v396 = vmul.f32 %v280, %v335
  %v397 = vmul.f32 %v281, %v339
  %v398 = vmul.f32 %v282, %v343
  %v399 = vmul.f32 %v283, %v347
  %v400 = vmul.f32 %v284, %v335
  %v401 = vmul.f32 %v285, %v339
  %v402 = vmul.f32 %v286, %v343
  %v403 = vmul.f32 %v287, %v347
  %v404 = vmul.f32 %v288, %v351
  %v405 = vmul.f32 %v289, %v355
  %v406 = vmul.f32 %v290, %v359
  %v407 = vmul.f32 %v291, %v363
  %v408 = vmul.f32 %v292, %v351
  %v409 = vmul.f32 %v293, %v355
  %v410 = vmul.f32 %v294, %v359
  %v411 = vmul.f32 %v295, %v363
  %v412 = vadd.f32 %v380, %v381
  %v413 = vadd.f32 %v412, %v382
  %v414 = vadd.f32 %v413, %v383
  %415 = vadd.xlane.f32.xlu0 %v414
  %v416 = vpop.xlane.xlu0 %415
  %vm417 = vcmask 1043456
  %v418 = vsel %vm417, %v384, 0.0
  %v419 = vsel %vm417, %v385, 0.0
  %v420 = vadd.f32 %v418, %v419
  %v421 = vsel %vm417, %v386, 0.0
  %v422 = vadd.f32 %v420, %v421
  %v423 = vsel %vm417, %v387, 0.0
  %v424 = vadd.f32 %v422, %v423
  %425 = vadd.xlane.f32.xlu0 %v424
  %v426 = vpop.xlane.xlu0 %425
  %v427 = vadd.f32 %v388, %v389
  %v428 = vadd.f32 %v427, %v390
  %v429 = vadd.f32 %v428, %v391
  %430 = vadd.xlane.f32.xlu0 %v429
  %v431 = vpop.xlane.xlu0 %430
  %v432 = vsel %vm417, %v392, 0.0
  %v433 = vsel %vm417, %v393, 0.0
  %v434 = vadd.f32 %v432, %v433
  %v435 = vsel %vm417, %v394, 0.0
  %v436 = vadd.f32 %v434, %v435
  %v437 = vsel %vm417, %v395, 0.0
  %v438 = vadd.f32 %v436, %v437
  %439 = vadd.xlane.f32.xlu0 %v438
  %v440 = vpop.xlane.xlu0 %439
  %v441 = vadd.f32 %v396, %v397
  %v442 = vadd.f32 %v441, %v398
  %v443 = vadd.f32 %v442, %v399
  %444 = vadd.xlane.f32.xlu0 %v443
  %v445 = vpop.xlane.xlu0 %444
  %v446 = vsel %vm417, %v400, 0.0
  %v447 = vsel %vm417, %v401, 0.0
  %v448 = vadd.f32 %v446, %v447
  %v449 = vsel %vm417, %v402, 0.0
  %v450 = vadd.f32 %v448, %v449
  %v451 = vsel %vm417, %v403, 0.0
  %v452 = vadd.f32 %v450, %v451
  %453 = vadd.xlane.f32.xlu0 %v452
  %v454 = vpop.xlane.xlu0 %453
  %v455 = vadd.f32 %v404, %v405
  %v456 = vadd.f32 %v455, %v406
  %v457 = vadd.f32 %v456, %v407
  %458 = vadd.xlane.f32.xlu0 %v457
  %v459 = vpop.xlane.xlu0 %458
  %v460 = vsel %vm417, %v408, 0.0
  %v461 = vsel %vm417, %v409, 0.0
  %v462 = vadd.f32 %v460, %v461
  %v463 = vsel %vm417, %v410, 0.0
  %v464 = vadd.f32 %v462, %v463
  %v465 = vsel %vm417, %v411, 0.0
  %v466 = vadd.f32 %v464, %v465
  %467 = vadd.xlane.f32.xlu0 %v466
  %v468 = vpop.xlane.xlu0 %467
  %v469 = vmul.f32 %v416, 0.001953125
  %v470 = vmul.f32 %v426, 0.001953125
  %v471 = vmul.f32 %v431, 0.001953125
  %v472 = vmul.f32 %v440, 0.001953125
  %v473 = vmul.f32 %v445, 0.001953125
  %v474 = vmul.f32 %v454, 0.001953125
  %v475 = vmul.f32 %v459, 0.001953125
  %v476 = vmul.f32 %v468, 0.001953125
  %v477 = vsub.f32 %v380, %v469
  %v478 = vsub.f32 %v381, %v469
  %v479 = vsub.f32 %v382, %v469
  %v480 = vsub.f32 %v383, %v469
  %v481 = vsub.f32 %v384, %v470
  %v482 = vsub.f32 %v385, %v470
  %v483 = vsub.f32 %v386, %v470
  %v484 = vsub.f32 %v387, %v470
  %v485 = vsub.f32 %v388, %v471
  %v486 = vsub.f32 %v389, %v471
  %v487 = vsub.f32 %v390, %v471
  %v488 = vsub.f32 %v391, %v471
  %v489 = vsub.f32 %v392, %v472
  %v490 = vsub.f32 %v393, %v472
  %v491 = vsub.f32 %v394, %v472
  %v492 = vsub.f32 %v395, %v472
  %v493 = vsub.f32 %v396, %v473
  %v494 = vsub.f32 %v397, %v473
  %v495 = vsub.f32 %v398, %v473
  %v496 = vsub.f32 %v399, %v473
  %v497 = vsub.f32 %v400, %v474
  %v498 = vsub.f32 %v401, %v474
  %v499 = vsub.f32 %v402, %v474
  %v500 = vsub.f32 %v403, %v474
  %v501 = vsub.f32 %v404, %v475
  %v502 = vsub.f32 %v405, %v475
  %v503 = vsub.f32 %v406, %v475
  %v504 = vsub.f32 %v407, %v475
  %v505 = vsub.f32 %v408, %v476
  %v506 = vsub.f32 %v409, %v476
  %v507 = vsub.f32 %v410, %v476
  %v508 = vsub.f32 %v411, %v476
  %v509 = vmul.f32 %v477, %v477
  %v510 = vmul.f32 %v478, %v478
  %v511 = vmul.f32 %v479, %v479
  %v512 = vmul.f32 %v480, %v480
  %v513 = vmul.f32 %v481, %v481
  %v514 = vmul.f32 %v482, %v482
  %v515 = vmul.f32 %v483, %v483
  %v516 = vmul.f32 %v484, %v484
  %v517 = vmul.f32 %v485, %v485
  %v518 = vmul.f32 %v486, %v486
  %v519 = vmul.f32 %v487, %v487
  %v520 = vmul.f32 %v488, %v488
  %v521 = vmul.f32 %v489, %v489
  %v522 = vmul.f32 %v490, %v490
  %v523 = vmul.f32 %v491, %v491
  %v524 = vmul.f32 %v492, %v492
  %v525 = vmul.f32 %v493, %v493
  %v526 = vmul.f32 %v494, %v494
  %v527 = vmul.f32 %v495, %v495
  %v528 = vmul.f32 %v496, %v496
  %v529 = vmul.f32 %v497, %v497
  %v530 = vmul.f32 %v498, %v498
  %v531 = vmul.f32 %v499, %v499
  %v532 = vmul.f32 %v500, %v500
  %v533 = vmul.f32 %v501, %v501
  %v534 = vmul.f32 %v502, %v502
  %v535 = vmul.f32 %v503, %v503
  %v536 = vmul.f32 %v504, %v504
  %v537 = vmul.f32 %v505, %v505
  %v538 = vmul.f32 %v506, %v506
  %v539 = vmul.f32 %v507, %v507
  %v540 = vmul.f32 %v508, %v508
  %v541 = vadd.f32 %v509, %v510
  %v542 = vadd.f32 %v541, %v511
  %v543 = vadd.f32 %v542, %v512
  %544 = vadd.xlane.f32.xlu0 %v543
  %v545 = vpop.xlane.xlu0 %544
  %v546 = vsel %vm417, %v513, 0.0
  %v547 = vsel %vm417, %v514, 0.0
  %v548 = vadd.f32 %v546, %v547
  %v549 = vsel %vm417, %v515, 0.0
  %v550 = vadd.f32 %v548, %v549
  %v551 = vsel %vm417, %v516, 0.0
  %v552 = vadd.f32 %v550, %v551
  %553 = vadd.xlane.f32.xlu0 %v552
  %v554 = vpop.xlane.xlu0 %553
  %v555 = vadd.f32 %v517, %v518
  %v556 = vadd.f32 %v555, %v519
  %v557 = vadd.f32 %v556, %v520
  %558 = vadd.xlane.f32.xlu0 %v557
  %v559 = vpop.xlane.xlu0 %558
  %v560 = vsel %vm417, %v521, 0.0
  %v561 = vsel %vm417, %v522, 0.0
  %v562 = vadd.f32 %v560, %v561
  %v563 = vsel %vm417, %v523, 0.0
  %v564 = vadd.f32 %v562, %v563
  %v565 = vsel %vm417, %v524, 0.0
  %v566 = vadd.f32 %v564, %v565
  %567 = vadd.xlane.f32.xlu0 %v566
  %v568 = vpop.xlane.xlu0 %567
  %v569 = vadd.f32 %v525, %v526
  %v570 = vadd.f32 %v569, %v527
  %v571 = vadd.f32 %v570, %v528
  %572 = vadd.xlane.f32.xlu0 %v571
  %v573 = vpop.xlane.xlu0 %572
  %v574 = vsel %vm417, %v529, 0.0
  %v575 = vsel %vm417, %v530, 0.0
  %v576 = vadd.f32 %v574, %v575
  %v577 = vsel %vm417, %v531, 0.0
  %v578 = vadd.f32 %v576, %v577
  %v579 = vsel %vm417, %v532, 0.0
  %v580 = vadd.f32 %v578, %v579
  %581 = vadd.xlane.f32.xlu0 %v580
  %v582 = vpop.xlane.xlu0 %581
  %v583 = vadd.f32 %v533, %v534
  %v584 = vadd.f32 %v583, %v535
  %v585 = vadd.f32 %v584, %v536
  %586 = vadd.xlane.f32.xlu0 %v585
  %v587 = vpop.xlane.xlu0 %586
  %v588 = vsel %vm417, %v537, 0.0
  %v589 = vsel %vm417, %v538, 0.0
  %v590 = vadd.f32 %v588, %v589
  %v591 = vsel %vm417, %v539, 0.0
  %v592 = vadd.f32 %v590, %v591
  %v593 = vsel %vm417, %v540, 0.0
  %v594 = vadd.f32 %v592, %v593
  %595 = vadd.xlane.f32.xlu0 %v594
  %v596 = vpop.xlane.xlu0 %595
  %v597 = vmul.f32 %v545, 0.001953125
  %v598 = vmul.f32 %v554, 0.001953125
  %v599 = vmul.f32 %v559, 0.001953125
  %v600 = vmul.f32 %v568, 0.001953125
  %v601 = vmul.f32 %v573, 0.001953125
  %v602 = vmul.f32 %v582, 0.001953125
  %v603 = vmul.f32 %v587, 0.001953125
  %v604 = vmul.f32 %v596, 0.001953125
  %v605 = vadd.f32 %v597, 1e-06
  %v606 = vadd.f32 %v598, 1e-06
  %v607 = vadd.f32 %v599, 1e-06
  %v608 = vadd.f32 %v600, 1e-06
  %v609 = vadd.f32 %v601, 1e-06
  %v610 = vadd.f32 %v602, 1e-06
  %v611 = vadd.f32 %v603, 1e-06
  %v612 = vadd.f32 %v604, 1e-06
  %v613 = vrsqrt.pop %v605
  %v614 = vrsqrt.pop %v606
  %v615 = vrsqrt.pop %v607
  %v616 = vrsqrt.pop %v608
  %v617 = vrsqrt.pop %v609
  %v618 = vrsqrt.pop %v610
  %v619 = vrsqrt.pop %v611
  %v620 = vrsqrt.pop %v612
  %v621 = vmul.f32 %v477, %v613
  %v622 = vmul.f32 %v478, %v613
  %v623 = vmul.f32 %v479, %v613
  %v624 = vmul.f32 %v480, %v613
  %v625 = vmul.f32 %v481, %v614
  %v626 = vmul.f32 %v482, %v614
  %v627 = vmul.f32 %v483, %v614
  %v628 = vmul.f32 %v484, %v614
  %v629 = vmul.f32 %v485, %v615
  %v630 = vmul.f32 %v486, %v615
  %v631 = vmul.f32 %v487, %v615
  %v632 = vmul.f32 %v488, %v615
  %v633 = vmul.f32 %v489, %v616
  %v634 = vmul.f32 %v490, %v616
  %v635 = vmul.f32 %v491, %v616
  %v636 = vmul.f32 %v492, %v616
  %v637 = vmul.f32 %v493, %v617
  %v638 = vmul.f32 %v494, %v617
  %v639 = vmul.f32 %v495, %v617
  %v640 = vmul.f32 %v496, %v617
  %v641 = vmul.f32 %v497, %v618
  %v642 = vmul.f32 %v498, %v618
  %v643 = vmul.f32 %v499, %v618
  %v644 = vmul.f32 %v500, %v618
  %v645 = vmul.f32 %v501, %v619
  %v646 = vmul.f32 %v502, %v619
  %v647 = vmul.f32 %v503, %v619
  %v648 = vmul.f32 %v504, %v619
  %v649 = vmul.f32 %v505, %v620
  %v650 = vmul.f32 %v506, %v620
  %v651 = vmul.f32 %v507, %v620
  %v652 = vmul.f32 %v508, %v620
  %653 = vst [vmem:[%s4] sm:$0xff] %v621
  %654 = vst [vmem:[%s4 + $0x8] sm:$0xff] %v622
  %655 = vst [vmem:[%s4 + $0x10] sm:$0xff] %v623
  %656 = vst [vmem:[%s4 + $0x18] sm:$0xff] %v624
  %657 = vst [vmem:[%s4 + $0x20] sm:$0xf] %v625
  %658 = vst [vmem:[%s4 + $0x28] sm:$0xf] %v626
  %659 = vst [vmem:[%s4 + $0x30] sm:$0xf] %v627
  %660 = vst [vmem:[%s4 + $0x38] sm:$0xf] %v628
  %661 = vst [vmem:[%s4 + $0x40] sm:$0xff] %v629
  %662 = vst [vmem:[%s4 + $0x48] sm:$0xff] %v630
  %663 = vst [vmem:[%s4 + $0x50] sm:$0xff] %v631
  %664 = vst [vmem:[%s4 + $0x58] sm:$0xff] %v632
  %665 = vst [vmem:[%s4 + $0x60] sm:$0xf] %v633
  %666 = vst [vmem:[%s4 + $0x68] sm:$0xf] %v634
  %667 = vst [vmem:[%s4 + $0x70] sm:$0xf] %v635
  %668 = vst [vmem:[%s4 + $0x78] sm:$0xf] %v636
  %669 = vst [vmem:[%s4 + $0x80] sm:$0xff] %v637
  %670 = vst [vmem:[%s4 + $0x88] sm:$0xff] %v638
  %671 = vst [vmem:[%s4 + $0x90] sm:$0xff] %v639
  %672 = vst [vmem:[%s4 + $0x98] sm:$0xff] %v640
  %673 = vst [vmem:[%s4 + $0xa0] sm:$0xf] %v641
  %674 = vst [vmem:[%s4 + $0xa8] sm:$0xf] %v642
  %675 = vst [vmem:[%s4 + $0xb0] sm:$0xf] %v643
  %676 = vst [vmem:[%s4 + $0xb8] sm:$0xf] %v644
  %677 = vst [vmem:[%s4 + $0xc0] sm:$0xff] %v645
  %678 = vst [vmem:[%s4 + $0xc8] sm:$0xff] %v646
  %679 = vst [vmem:[%s4 + $0xd0] sm:$0xff] %v647
  %680 = vst [vmem:[%s4 + $0xd8] sm:$0xff] %v648
  %681 = vst [vmem:[%s4 + $0xe0] sm:$0xf] %v649
  %682 = vst [vmem:[%s4 + $0xe8] sm:$0xf] %v650
  %683 = vst [vmem:[%s4 + $0xf0] sm:$0xf] %v651
  %684 = vst [vmem:[%s4 + $0xf8] sm:$0xf] %v652
  // Predicated region
  $region18: #{tpu_custom_call.1} parent=0 // pred_check
    _
  $region19: #{tpu_custom_call.1} parent=0 // pred_check_branch
    %686 = sbr.rel (0) target = $region21
  $region20: #{tpu_custom_call.1} parent=0 // pred_region
    _
  $region21: #{tpu_custom_call.1} parent=0 // pred_fallthru
    _
  // Predicated region
  $region22: #{tpu_custom_call.1} parent=0 // pred_check
    _
  $region23: #{tpu_custom_call.1} parent=0 // pred_check_branch
    %688 = sbr.rel (0) target = $region25
  $region24: #{tpu_custom_call.1} parent=0 // pred_region
    _
  $region25: #{tpu_custom_call.1} parent=0 // pred_fallthru
    _

</llo_original>
